<compile_context>
chip_gen: v5e
topology: v5e:2x2
jax: 0.10.0
libtpu: 0.0.40
codegen_flags: <defaults>
</compile_context>

<pallas_src>
import jax
import jax.numpy as jnp
from jax import lax
from jax.experimental import pallas as pl
from jax.experimental.pallas import tpu as pltpu


def _round_up(x, m):
    return (x + m - 1) // m * m


# ----------------------------------------------------------------------------
# Fused edge-major kernel.
# grid = (num_edge_tiles,)  ["arbitrary"]  -- m / deg are resident accumulators;
# the node update runs in the epilogue of the last edge tile (single launch).
# ----------------------------------------------------------------------------
def _rrn_edge_major_kernel(src_ref, dst_ref, p1_ref, h_ref,
                           w2_ref, b_ref, wn1_ref, wn2_ref, bn_ref,
                           hnew_ref, m_ref,
                           deg_ref):
    ei = pl.program_id(0)
    n_pad = h_ref.shape[0]

    @pl.when(ei == 0)
    def _():
        m_ref[...] = jnp.zeros_like(m_ref)
        deg_ref[...] = jnp.zeros_like(deg_ref)

    src = src_ref[...]                                   # (tile_e, 1) int32
    dst = dst_ref[...]                                   # (1, tile_e) int32

    # rank-1 iotas; the comparisons broadcast (no (N_pad, tile_e) int32 temps)
    lane_iota = lax.broadcasted_iota(jnp.int32, (1, n_pad), 1)   # (1, N_pad)
    sub_iota = lax.broadcasted_iota(jnp.int32, (n_pad, 1), 0)    # (N_pad, 1)

    # MXU-natural orientations; padded edges carry id == N_pad -> all-zero rows /
    # columns -> zero contribution to both m and deg.
    onehot_src = (src == lane_iota).astype(jnp.float32)  # (tile_e, N_pad)
    onehot_dst = (sub_iota == dst).astype(jnp.float32)   # (N_pad, tile_e)

    # gather the source half of the edge messages: gathered[e] = p1[src[e]]
    gathered = jnp.dot(onehot_src, p1_ref[...],
                       preferred_element_type=jnp.float32)       # (tile_e, Hp)
    # scatter-add into the resident message accumulator (plain contraction,
    # no transpose of a large operand)
    m_ref[...] += jnp.dot(onehot_dst, gathered,
                          preferred_element_type=jnp.float32)    # (N_pad, Hp)
    # in-degree accumulation (needed for the destination half + bias of msg)
    deg_ref[...] += jnp.sum(onehot_dst, axis=1, keepdims=True)   # (N_pad, 1)

    # edge dropout: nn.Dropout in eval mode is the identity -> no-op here.

    # ---- epilogue (last edge tile): finalize messages + node update ---------
    @pl.when(ei == pl.num_programs(0) - 1)
    def _():
        h = h_ref[...]                                            # (N_pad, Hp)
        p2 = jnp.dot(h, w2_ref[...], preferred_element_type=jnp.float32)
        m = m_ref[...] + deg_ref[...] * (p2 + b_ref[...])
        m_ref[...] = m
        z = (jnp.dot(h, wn1_ref[...], preferred_element_type=jnp.float32)
             + jnp.dot(m, wn2_ref[...], preferred_element_type=jnp.float32)
             + bn_ref[...])
        hnew_ref[...] = jnp.maximum(z, 0.0).astype(hnew_ref.dtype)


# ----------------------------------------------------------------------------
# Wrapper: padding / parameter plumbing + hoisted p1 (one XLA matmul).
# ----------------------------------------------------------------------------
def rrn_layer_forward(h, src_idx, dst_idx, params, *, tile_e=256):
    """One RRNLayer forward pass.

    h:        (N, H) float32 node features
    src_idx:  (E,)   int32 source node of each edge
    dst_idx:  (E,)   int32 destination node of each edge
    params:   dict with w_msg (2H,H), b_msg (H,), w_node (2H,H), b_node (H,)
    returns:  (h_new (N, H), m (N, H))
    """
    N, H = h.shape
    E = src_idx.shape[0]
    f32 = jnp.float32

    Hp = _round_up(H, 128)          # lane-dense hidden dim
    N_pad = _round_up(N, 8)         # sublane-aligned node dim

    tile_e = max(128, min(tile_e, _round_up(E, 128)))
    E_pad = _round_up(E, tile_e)

    # zero-extended operands (padded rows/lanes stay exactly zero)
    h_p = jnp.zeros((N_pad, Hp), f32).at[:N, :H].set(h.astype(f32))

    def pad_w(w):  # (H, H) -> (Hp, Hp)
        return jnp.zeros((Hp, Hp), f32).at[:H, :H].set(w.astype(f32))

    w1 = pad_w(params["w_msg"][:H])
    w2 = pad_w(params["w_msg"][H:])
    wn1 = pad_w(params["w_node"][:H])
    wn2 = pad_w(params["w_node"][H:])
    b = jnp.zeros((1, Hp), f32).at[0, :H].set(params["b_msg"].astype(f32))
    bn = jnp.zeros((1, Hp), f32).at[0, :H].set(params["b_node"].astype(f32))

    # Hoisted once: source half of the edge-message Linear (review opt #1).
    p1 = h_p @ w1                                               # (N_pad, Hp)

    # Padded (dummy) edges point at node id N_pad, which matches no row of the
    # 0..N_pad-1 iota -> their one-hot rows/columns are all zeros.
    pad_e = E_pad - E
    src2d = jnp.pad(src_idx.astype(jnp.int32), (0, pad_e),
                    constant_values=N_pad).reshape(E_pad, 1)
    dst2d = jnp.pad(dst_idx.astype(jnp.int32), (0, pad_e),
                    constant_values=N_pad).reshape(1, E_pad)

    grid = (E_pad // tile_e,)

    # Rough VMEM footprint (bytes) -> raise the scoped limit if needed
    # (v5e default 16 MiB, v6e/v7x 32 MiB scoped; cap at 64 MiB for v7x).
    est = 4 * (4 * N_pad * Hp                 # p1, h, m, h_new (resident)
               + 3 * Hp * Hp + 2 * Hp         # w2, wn1, wn2, biases
               + 3 * N_pad * tile_e           # one-hot temporaries (+ slack)
               + 2 * tile_e * Hp              # gathered tile + epilogue temps
               + N_pad * 128                  # deg scratch (lane-padded)
               ) + 4 * 2 * 2 * tile_e         # double-buffered int32 id tiles
    vmem_limit = int(min(max(2 * est, 32 * 2**20), 64 * 2**20))

    h_new_p, m_p = pl.pallas_call(
        _rrn_edge_major_kernel,
        out_shape=(jax.ShapeDtypeStruct((N_pad, Hp), f32),
                   jax.ShapeDtypeStruct((N_pad, Hp), f32)),
        grid=grid,
        in_specs=[
            pl.BlockSpec((tile_e, 1), lambda ei: (ei, 0)),   # src ids (sublane)
            pl.BlockSpec((1, tile_e), lambda ei: (0, ei)),   # dst ids (lane)
            pl.BlockSpec((N_pad, Hp), lambda ei: (0, 0)),    # p1 = h @ W_msg[:H]
            pl.BlockSpec((N_pad, Hp), lambda ei: (0, 0)),    # h (resident)
            pl.BlockSpec((Hp, Hp), lambda ei: (0, 0)),       # W_msg[H:]
            pl.BlockSpec((1, Hp), lambda ei: (0, 0)),        # b_msg
            pl.BlockSpec((Hp, Hp), lambda ei: (0, 0)),       # W_node[:H]
            pl.BlockSpec((Hp, Hp), lambda ei: (0, 0)),       # W_node[H:]
            pl.BlockSpec((1, Hp), lambda ei: (0, 0)),        # b_node
        ],
        out_specs=(
            pl.BlockSpec((N_pad, Hp), lambda ei: (0, 0)),    # h_new
            pl.BlockSpec((N_pad, Hp), lambda ei: (0, 0)),    # m (resident acc)
        ),
        scratch_shapes=[pltpu.VMEM((N_pad, 1), jnp.float32)],  # in-degree acc
        compiler_params=pltpu.CompilerParams(
            dimension_semantics=("arbitrary",),
            vmem_limit_bytes=vmem_limit),
    )(src2d, dst2d, p1, h_p, w2, b, wn1, wn2, bn)

    return h_new_p[:N, :H], m_p[:N, :H]


# ----------------------------------------------------------------------------
# Pure-JAX reference (for correctness check)
# ----------------------------------------------------------------------------
def rrn_layer_ref(h, src_idx, dst_idx, params):
    N, H = h.shape
    e = jnp.concatenate([h[src_idx], h[dst_idx]], axis=-1) @ params["w_msg"] \
        + params["b_msg"]
    m = jax.ops.segment_sum(e, dst_idx, num_segments=N)
    z = jnp.concatenate([h, m], axis=-1) @ params["w_node"] + params["b_node"]
    return jnp.maximum(z, 0.0), m


if __name__ == "__main__":
    N, H = 16, 32                 # nodes, hidden size
    key = jax.random.PRNGKey(0)
    k_h, k_wm, k_bm, k_wn, k_bn, k_h2, k_e = jax.random.split(key, 7)

    params = {
        "w_msg": jax.random.normal(k_wm, (2 * H, H), jnp.float32) * 0.1,
        "b_msg": jax.random.normal(k_bm, (H,), jnp.float32) * 0.1,
        "w_node": jax.random.normal(k_wn, (2 * H, H), jnp.float32) * 0.1,
        "b_node": jax.random.normal(k_bn, (H,), jnp.float32) * 0.1,
    }

    # -- test 1: fully connected directed graph with self loops (E = 256) ----
    src_idx = jnp.repeat(jnp.arange(N, dtype=jnp.int32), N)
    dst_idx = jnp.tile(jnp.arange(N, dtype=jnp.int32), N)
    h = jax.random.normal(k_h, (N, H), dtype=jnp.float32)

    h_ref_out, m_ref_out = rrn_layer_ref(h, src_idx, dst_idx, params)

    h_new, m = jax.block_until_ready(
        rrn_layer_forward(h, src_idx, dst_idx, params))        # single edge tile
    assert jnp.allclose(m, m_ref_out, atol=5e-4, rtol=5e-4)
    assert jnp.allclose(h_new, h_ref_out, atol=5e-4, rtol=5e-4)

    h_new2, m2 = jax.block_until_ready(
        rrn_layer_forward(h, src_idx, dst_idx, params, tile_e=128))  # 2 edge tiles
    assert jnp.allclose(m2, m_ref_out, atol=5e-4, rtol=5e-4)
    assert jnp.allclose(h_new2, h_ref_out, atol=5e-4, rtol=5e-4)

    # -- test 2: irregular graph (N not multiple of 8, E not multiple of 128) -
    N2, E2 = 13, 50
    h2 = jax.random.normal(k_h2, (N2, H), dtype=jnp.float32)
    ek1, ek2 = jax.random.split(k_e)
    src2 = jax.random.randint(ek1, (E2,), 0, N2, dtype=jnp.int32)
    dst2 = jax.random.randint(ek2, (E2,), 0, N2, dtype=jnp.int32)

    h_ref2, m_ref2 = rrn_layer_ref(h2, src2, dst2, params)
    h_new3, m3 = jax.block_until_ready(
        rrn_layer_forward(h2, src2, dst2, params))
    assert jnp.allclose(m3, m_ref2, atol=5e-4, rtol=5e-4)
    assert jnp.allclose(h_new3, h_ref2, atol=5e-4, rtol=5e-4)

    print("KERNEL_OK")
</pallas_src>

<mosaic_0001>
module attributes {stable_mosaic.version = 11 : i64} {
  func.func @_rrn_edge_major_kernel(%arg0: i32, %arg1: memref<256x1xi32, #tpu.memory_space<vmem>>, %arg2: memref<1x256xi32, #tpu.memory_space<vmem>>, %arg3: memref<16x128xf32, #tpu.memory_space<vmem>>, %arg4: memref<16x128xf32, #tpu.memory_space<vmem>>, %arg5: memref<128x128xf32, #tpu.memory_space<vmem>>, %arg6: memref<1x128xf32, #tpu.memory_space<vmem>>, %arg7: memref<128x128xf32, #tpu.memory_space<vmem>>, %arg8: memref<128x128xf32, #tpu.memory_space<vmem>>, %arg9: memref<1x128xf32, #tpu.memory_space<vmem>>, %arg10: memref<16x128xf32, #tpu.memory_space<vmem>>, %arg11: memref<16x128xf32, #tpu.memory_space<vmem>>, %arg12: memref<16x1xf32, #tpu.memory_space<vmem>>) attributes {dimension_semantics = [#tpu.dimension_semantics<arbitrary>], iteration_bounds = array<i64: 1>, scalar_prefetch = 0 : i64, scratch_operands = 1 : i64, tpu.core_type = #tpu.core_type<tc>, window_params = [{transform_indices = @transform_0, window_bounds = array<i64: 256, 1>}, {transform_indices = @transform_1, window_bounds = array<i64: 1, 256>}, {pipeline_mode = #tpu.pipeline_mode<synchronous>, transform_indices = @transform_2, window_bounds = array<i64: 16, 128>}, {pipeline_mode = #tpu.pipeline_mode<synchronous>, transform_indices = @transform_3, window_bounds = array<i64: 16, 128>}, {pipeline_mode = #tpu.pipeline_mode<synchronous>, transform_indices = @transform_4, window_bounds = array<i64: 128, 128>}, {pipeline_mode = #tpu.pipeline_mode<synchronous>, transform_indices = @transform_5, window_bounds = array<i64: 1, 128>}, {pipeline_mode = #tpu.pipeline_mode<synchronous>, transform_indices = @transform_6, window_bounds = array<i64: 128, 128>}, {pipeline_mode = #tpu.pipeline_mode<synchronous>, transform_indices = @transform_7, window_bounds = array<i64: 128, 128>}, {pipeline_mode = #tpu.pipeline_mode<synchronous>, transform_indices = @transform_8, window_bounds = array<i64: 1, 128>}, {pipeline_mode = #tpu.pipeline_mode<synchronous>, transform_indices = @transform_9, window_bounds = array<i64: 16, 128>}, {pipeline_mode = #tpu.pipeline_mode<synchronous>, transform_indices = @transform_10, window_bounds = array<i64: 16, 128>}]} {
    %c0_i32 = arith.constant 0 : i32
    %0 = arith.cmpi eq, %arg0, %c0_i32 : i32
    %1 = arith.extui %0 : i1 to i32
    %c0_i32_0 = arith.constant 0 : i32
    %2 = arith.cmpi ne, %1, %c0_i32_0 : i32
    scf.if %2 {
      %cst_18 = arith.constant 0.000000e+00 : f32
      %31 = vector.broadcast %cst_18 : f32 to vector<16x128xf32>
      %c0_19 = arith.constant 0 : index
      %c0_20 = arith.constant 0 : index
      %32 = vector.load %arg11[%c0_19, %c0_20] : memref<16x128xf32, #tpu.memory_space<vmem>>, vector<16x128xf32>
      tpu.vector_store %arg11[%c0_19, %c0_20], %31 {strides = array<i32>} : memref<16x128xf32, #tpu.memory_space<vmem>>, vector<16x128xf32>,
      %cst_21 = arith.constant 0.000000e+00 : f32
      %33 = vector.broadcast %cst_21 : f32 to vector<16x1xf32>
      %c0_22 = arith.constant 0 : index
      %c0_23 = arith.constant 0 : index
      %34 = vector.load %arg12[%c0_22, %c0_23] : memref<16x1xf32, #tpu.memory_space<vmem>>, vector<16x1xf32>
      tpu.vector_store %arg12[%c0_22, %c0_23], %33 {strides = array<i32>} : memref<16x1xf32, #tpu.memory_space<vmem>>, vector<16x1xf32>,
    } else {
    }
    %c0 = arith.constant 0 : index
    %c0_1 = arith.constant 0 : index
    %3 = vector.load %arg1[%c0, %c0_1] : memref<256x1xi32, #tpu.memory_space<vmem>>, vector<256x1xi32>
    %c0_2 = arith.constant 0 : index
    %c0_3 = arith.constant 0 : index
    %4 = vector.load %arg2[%c0_2, %c0_3] : memref<1x256xi32, #tpu.memory_space<vmem>>, vector<1x256xi32>
    %5 = tpu.iota {dimensions = array<i32: 1>} : vector<1x16xi32>
    %6 = tpu.iota {dimensions = array<i32: 0>} : vector<16x1xi32>
    %7 = vector.broadcast %3 : vector<256x1xi32> to vector<256x16xi32>
    %8 = vector.broadcast %5 : vector<1x16xi32> to vector<256x16xi32>
    %9 = arith.cmpi eq, %7, %8 : vector<256x16xi32>
    %10 = arith.extui %9 : vector<256x16xi1> to vector<256x16xi32>
    %11 = arith.sitofp %10 : vector<256x16xi32> to vector<256x16xf32>
    %12 = vector.broadcast %6 : vector<16x1xi32> to vector<16x256xi32>
    %13 = vector.broadcast %4 : vector<1x256xi32> to vector<16x256xi32>
    %14 = arith.cmpi eq, %12, %13 : vector<16x256xi32>
    %15 = arith.extui %14 : vector<16x256xi1> to vector<16x256xi32>
    %16 = arith.sitofp %15 : vector<16x256xi32> to vector<16x256xf32>
    %c0_4 = arith.constant 0 : index
    %c0_5 = arith.constant 0 : index
    %17 = vector.load %arg3[%c0_4, %c0_5] : memref<16x128xf32, #tpu.memory_space<vmem>>, vector<16x128xf32>
    %cst = arith.constant dense<0.000000e+00> : vector<256x128xf32>
    %18 = tpu.matmul %11, %17, %cst {dimension_numbers = #tpu.dot_dimension_numbers<[1], [0], [0], [1], [0, 0, 1, 1], [], []>} : vector<256x16xf32>, vector<16x128xf32>, vector<256x128xf32> -> vector<256x128xf32>
    %c0_6 = arith.constant 0 : index
    %c0_7 = arith.constant 0 : index
    %19 = vector.load %arg11[%c0_6, %c0_7] : memref<16x128xf32, #tpu.memory_space<vmem>>, vector<16x128xf32>
    %cst_8 = arith.constant dense<0.000000e+00> : vector<16x128xf32>
    %20 = tpu.matmul %16, %18, %cst_8 {dimension_numbers = #tpu.dot_dimension_numbers<[1], [0], [0], [1], [0, 0, 1, 1], [], []>} : vector<16x256xf32>, vector<256x128xf32>, vector<16x128xf32> -> vector<16x128xf32>
    %21 = arith.addf %19, %20 : vector<16x128xf32>
    %c0_9 = arith.constant 0 : index
    %c0_10 = arith.constant 0 : index
    %22 = vector.load %arg11[%c0_9, %c0_10] : memref<16x128xf32, #tpu.memory_space<vmem>>, vector<16x128xf32>
    tpu.vector_store %arg11[%c0_9, %c0_10], %21 {strides = array<i32>} : memref<16x128xf32, #tpu.memory_space<vmem>>, vector<16x128xf32>,
    %c0_11 = arith.constant 0 : index
    %c0_12 = arith.constant 0 : index
    %23 = vector.load %arg12[%c0_11, %c0_12] : memref<16x1xf32, #tpu.memory_space<vmem>>, vector<16x1xf32>
    %cst_13 = arith.constant dense<0.000000e+00> : vector<16xf32>
    %24 = vector.multi_reduction <add>, %16, %cst_13 [1] : vector<16x256xf32> to vector<16xf32>
    %25 = vector.shape_cast %24 : vector<16xf32> to vector<16x1xf32>
    %26 = arith.addf %23, %25 : vector<16x1xf32>
    %c0_14 = arith.constant 0 : index
    %c0_15 = arith.constant 0 : index
    %27 = vector.load %arg12[%c0_14, %c0_15] : memref<16x1xf32, #tpu.memory_space<vmem>>, vector<16x1xf32>
    tpu.vector_store %arg12[%c0_14, %c0_15], %26 {strides = array<i32>} : memref<16x1xf32, #tpu.memory_space<vmem>>, vector<16x1xf32>,
    %c0_i32_16 = arith.constant 0 : i32
    %28 = arith.cmpi eq, %arg0, %c0_i32_16 : i32
    %29 = arith.extui %28 : i1 to i32
    %c0_i32_17 = arith.constant 0 : i32
    %30 = arith.cmpi ne, %29, %c0_i32_17 : i32
    scf.if %30 {
      %c0_18 = arith.constant 0 : index
      %c0_19 = arith.constant 0 : index
      %31 = vector.load %arg4[%c0_18, %c0_19] : memref<16x128xf32, #tpu.memory_space<vmem>>, vector<16x128xf32>
      %c0_20 = arith.constant 0 : index
      %c0_21 = arith.constant 0 : index
      %32 = vector.load %arg5[%c0_20, %c0_21] : memref<128x128xf32, #tpu.memory_space<vmem>>, vector<128x128xf32>
      %cst_22 = arith.constant dense<0.000000e+00> : vector<16x128xf32>
      %33 = tpu.matmul %31, %32, %cst_22 {dimension_numbers = #tpu.dot_dimension_numbers<[1], [0], [0], [1], [0, 0, 1, 1], [], []>} : vector<16x128xf32>, vector<128x128xf32>, vector<16x128xf32> -> vector<16x128xf32>
      %c0_23 = arith.constant 0 : index
      %c0_24 = arith.constant 0 : index
      %34 = vector.load %arg11[%c0_23, %c0_24] : memref<16x128xf32, #tpu.memory_space<vmem>>, vector<16x128xf32>
      %c0_25 = arith.constant 0 : index
      %c0_26 = arith.constant 0 : index
      %35 = vector.load %arg12[%c0_25, %c0_26] : memref<16x1xf32, #tpu.memory_space<vmem>>, vector<16x1xf32>
      %c0_27 = arith.constant 0 : index
      %c0_28 = arith.constant 0 : index
      %36 = vector.load %arg6[%c0_27, %c0_28] : memref<1x128xf32, #tpu.memory_space<vmem>>, vector<1x128xf32>
      %37 = vector.broadcast %36 : vector<1x128xf32> to vector<16x128xf32>
      %38 = arith.addf %33, %37 : vector<16x128xf32>
      %39 = vector.broadcast %35 : vector<16x1xf32> to vector<16x128xf32>
      %40 = arith.mulf %39, %38 : vector<16x128xf32>
      %41 = arith.addf %34, %40 : vector<16x128xf32>
      %c0_29 = arith.constant 0 : index
      %c0_30 = arith.constant 0 : index
      %42 = vector.load %arg11[%c0_29, %c0_30] : memref<16x128xf32, #tpu.memory_space<vmem>>, vector<16x128xf32>
      tpu.vector_store %arg11[%c0_29, %c0_30], %41 {strides = array<i32>} : memref<16x128xf32, #tpu.memory_space<vmem>>, vector<16x128xf32>,
      %c0_31 = arith.constant 0 : index
      %c0_32 = arith.constant 0 : index
      %43 = vector.load %arg7[%c0_31, %c0_32] : memref<128x128xf32, #tpu.memory_space<vmem>>, vector<128x128xf32>
      %cst_33 = arith.constant dense<0.000000e+00> : vector<16x128xf32>
      %44 = tpu.matmul %31, %43, %cst_33 {dimension_numbers = #tpu.dot_dimension_numbers<[1], [0], [0], [1], [0, 0, 1, 1], [], []>} : vector<16x128xf32>, vector<128x128xf32>, vector<16x128xf32> -> vector<16x128xf32>
      %c0_34 = arith.constant 0 : index
      %c0_35 = arith.constant 0 : index
      %45 = vector.load %arg8[%c0_34, %c0_35] : memref<128x128xf32, #tpu.memory_space<vmem>>, vector<128x128xf32>
      %cst_36 = arith.constant dense<0.000000e+00> : vector<16x128xf32>
      %46 = tpu.matmul %41, %45, %cst_36 {dimension_numbers = #tpu.dot_dimension_numbers<[1], [0], [0], [1], [0, 0, 1, 1], [], []>} : vector<16x128xf32>, vector<128x128xf32>, vector<16x128xf32> -> vector<16x128xf32>
      %47 = arith.addf %44, %46 : vector<16x128xf32>
      %c0_37 = arith.constant 0 : index
      %c0_38 = arith.constant 0 : index
      %48 = vector.load %arg9[%c0_37, %c0_38] : memref<1x128xf32, #tpu.memory_space<vmem>>, vector<1x128xf32>
      %49 = vector.broadcast %48 : vector<1x128xf32> to vector<16x128xf32>
      %50 = arith.addf %47, %49 : vector<16x128xf32>
      %cst_39 = arith.constant 0.000000e+00 : f32
      %51 = vector.broadcast %cst_39 : f32 to vector<16x128xf32>
      %52 = arith.maximumf %50, %51 : vector<16x128xf32>
      %c0_40 = arith.constant 0 : index
      %c0_41 = arith.constant 0 : index
      %53 = vector.load %arg10[%c0_40, %c0_41] : memref<16x128xf32, #tpu.memory_space<vmem>>, vector<16x128xf32>
      tpu.vector_store %arg10[%c0_40, %c0_41], %52 {strides = array<i32>} : memref<16x128xf32, #tpu.memory_space<vmem>>, vector<16x128xf32>,
    } else {
    }
    return
  }
  func.func @transform_0(%arg0: i32) -> (i32, i32) {
    %c0_i32 = arith.constant 0 : i32
    %c0_i32_0 = arith.constant 0 : i32
    return %arg0, %c0_i32 : i32, i32
  }
  func.func @transform_1(%arg0: i32) -> (i32, i32) {
    %c0_i32 = arith.constant 0 : i32
    %c0_i32_0 = arith.constant 0 : i32
    return %c0_i32, %arg0 : i32, i32
  }
  func.func @transform_2(%arg0: i32) -> (i32, i32) {
    %c0_i32 = arith.constant 0 : i32
    %c0_i32_0 = arith.constant 0 : i32
    %c0_i32_1 = arith.constant 0 : i32
    return %c0_i32, %c0_i32_0 : i32, i32
  }
  func.func @transform_3(%arg0: i32) -> (i32, i32) {
    %c0_i32 = arith.constant 0 : i32
    %c0_i32_0 = arith.constant 0 : i32
    %c0_i32_1 = arith.constant 0 : i32
    return %c0_i32, %c0_i32_0 : i32, i32
  }
  func.func @transform_4(%arg0: i32) -> (i32, i32) {
    %c0_i32 = arith.constant 0 : i32
    %c0_i32_0 = arith.constant 0 : i32
    %c0_i32_1 = arith.constant 0 : i32
    return %c0_i32, %c0_i32_0 : i32, i32
  }
  func.func @transform_5(%arg0: i32) -> (i32, i32) {
    %c0_i32 = arith.constant 0 : i32
    %c0_i32_0 = arith.constant 0 : i32
    %c0_i32_1 = arith.constant 0 : i32
    return %c0_i32, %c0_i32_0 : i32, i32
  }
  func.func @transform_6(%arg0: i32) -> (i32, i32) {
    %c0_i32 = arith.constant 0 : i32
    %c0_i32_0 = arith.constant 0 : i32
    %c0_i32_1 = arith.constant 0 : i32
    return %c0_i32, %c0_i32_0 : i32, i32
  }
  func.func @transform_7(%arg0: i32) -> (i32, i32) {
    %c0_i32 = arith.constant 0 : i32
    %c0_i32_0 = arith.constant 0 : i32
    %c0_i32_1 = arith.constant 0 : i32
    return %c0_i32, %c0_i32_0 : i32, i32
  }
  func.func @transform_8(%arg0: i32) -> (i32, i32) {
    %c0_i32 = arith.constant 0 : i32
    %c0_i32_0 = arith.constant 0 : i32
    %c0_i32_1 = arith.constant 0 : i32
    return %c0_i32, %c0_i32_0 : i32, i32
  }
  func.func @transform_9(%arg0: i32) -> (i32, i32) {
    %c0_i32 = arith.constant 0 : i32
    %c0_i32_0 = arith.constant 0 : i32
    %c0_i32_1 = arith.constant 0 : i32
    return %c0_i32, %c0_i32_0 : i32, i32
  }
  func.func @transform_10(%arg0: i32) -> (i32, i32) {
    %c0_i32 = arith.constant 0 : i32
    %c0_i32_0 = arith.constant 0 : i32
    %c0_i32_1 = arith.constant 0 : i32
    return %c0_i32, %c0_i32_0 : i32, i32
  }
}

</mosaic_0001>

<llo_original>
// kernel: tpu_custom_call.1
$region0: #{tpu_custom_call.1}
  #allocation0 [shape = 'u32[]', space=smem, size = 0x4, offset = 0x4, fixed_abs, tag = 'smem constant byte address 0x4 - core index']
  #allocation1 [shape = 'u32[72,128]{1,0:T(1,128)}', space=vmem, size = 0x9000, scoped, tag = 'internal scratch']
  #allocation2 [shape = 'f32[16,1]{1,0:T(8,128)}', space=vmem, size = 0x2000, scoped, tag = 'scratch operand']
  %s0 = inlined_call_operand.vmem [shape: s32[256,1], index: 0, kind: input, shape index: {}]
  %s1 = inlined_call_operand.vmem [shape: s32[1,256], index: 1, kind: input, shape index: {}]
  %s2 = inlined_call_operand.hbm [shape: f32[16,128], index: 2, kind: input, shape index: {}]
  %s3 = inlined_call_operand.hbm [shape: f32[16,128], index: 3, kind: input, shape index: {}]
  %s4 = inlined_call_operand.vmem [shape: f32[128,128], index: 4, kind: input, shape index: {}]
  %s5 = inlined_call_operand.vmem [shape: f32[1,128], index: 5, kind: input, shape index: {}]
  %s6 = inlined_call_operand.vmem [shape: f32[128,128], index: 6, kind: input, shape index: {}]
  %s7 = inlined_call_operand.hbm [shape: f32[128,128], index: 7, kind: input, shape index: {}]
  %s8 = inlined_call_operand.vmem [shape: f32[1,128], index: 8, kind: input, shape index: {}]
  %s9 = inlined_call_operand.hbm [shape: f32[16,128], index: 9, kind: output, shape index: {0}]
  %s10 = inlined_call_operand.hbm [shape: f32[16,128], index: 10, kind: output, shape index: {1}]
  %11 = xla_tuple %s9, %s10
  %s12 = sld [smem:[#allocation0]]
  $region74: #{tpu_custom_call.1} parent=0
    _
  %s14 = ssub.s32 1, %s12
  %s15 = scalar_select 0, %s14, %s12
  $region1: #{tpu_custom_call.1} parent=0
    #allocation3 [shape = 'u8[8192]{0}', space=vmem, size = 0x2000, scoped, tag = 'input window, operand 2, single buffered']
    #allocation4 [shape = 's32[1]{0}', space=sflag, size = 0x4, scoped, tag = 'scoped memory for tpu_custom_call.1']
    #allocation5 [shape = 's32[1]{0}', space=sflag, size = 0x4, scoped, tag = 'scoped memory for tpu_custom_call.1']
    #allocation6 [shape = 'u8[8192]{0}', space=vmem, size = 0x2000, scoped, tag = 'input window, operand 3, single buffered']
    #allocation7 [shape = 's32[1]{0}', space=sflag, size = 0x4, scoped, tag = 'scoped memory for tpu_custom_call.1']
    #allocation8 [shape = 'u8[65536]{0}', space=vmem, size = 0x10000, scoped, tag = 'input window, operand 7, single buffered']
    #allocation9 [shape = 'u8[8192]{0}', space=vmem, size = 0x2000, scoped, tag = 'output window, operand 0, single buffered']
    #allocation10 [shape = 'u8[8192]{0}', space=vmem, size = 0x2000, scoped, tag = 'output window, operand 1, single buffered']
    #allocation11 [shape = 's32[1]{0}', space=sflag, size = 0x4, scoped, tag = 'scoped memory for tpu_custom_call.1']
    %16 = vsyncpa [#allocation4], 0
    %17 = vsyncpa [#allocation7], 0
    %18 = vsyncpa [#allocation5], 0
    %19 = vsyncpa [#allocation11], 0
    // Predicated region
    $region2: #{tpu_custom_call.1} parent=1 // pred_check
      _
    $region3: #{tpu_custom_call.1} parent=1 // pred_check_branch
      %21 = sbr.rel (0) target = $region5
    $region4: #{tpu_custom_call.1} parent=1 // pred_region
      _
    $region5: #{tpu_custom_call.1} parent=1 // pred_fallthru
      _
    // Predicated region
    $region6: #{tpu_custom_call.1} parent=1 // pred_check
      _
    $region7: #{tpu_custom_call.1} parent=1 // pred_check_branch
      %23 = sbr.rel (0) target = $region9
    $region8: #{tpu_custom_call.1} parent=1 // pred_region
      _
    $region9: #{tpu_custom_call.1} parent=1 // pred_fallthru
      _
    // Predicated region
    $region10: #{tpu_custom_call.1} parent=1 // pred_check
      _
    $region11: #{tpu_custom_call.1} parent=1 // pred_check_branch
      %25 = sbr.rel (0) target = $region13
    $region12: #{tpu_custom_call.1} parent=1 // pred_region
      %27 = vsyncadd [#allocation4], 0
      %s28 = sshll.u32 %s2, 4
      %s29 = int_to_ptr.hbm [resolvable:$true] %s28
      %s30 = sshll.u32 [#allocation3], 4
      %s31 = int_to_ptr.vmem [resolvable:$true] %s30
      %36 = dma.hbm_to_vmem [thread:$0]  %s29, 256, %s31, [#allocation4], 128, 128, 8
    $region13: #{tpu_custom_call.1} parent=1 // pred_fallthru
      _
    // Predicated region
    $region14: #{tpu_custom_call.1} parent=1 // pred_check
      _
    $region15: #{tpu_custom_call.1} parent=1 // pred_check_branch
      %38 = sbr.rel (0) target = $region17
    $region16: #{tpu_custom_call.1} parent=1 // pred_region
      %40 = vsyncadd [#allocation7], 0
      %s41 = sshll.u32 %s3, 4
      %s42 = int_to_ptr.hbm [resolvable:$true] %s41
      %s43 = sshll.u32 [#allocation6], 4
      %s44 = int_to_ptr.vmem [resolvable:$true] %s43
      %49 = dma.hbm_to_vmem [thread:$0]  %s42, 256, %s44, [#allocation7], 128, 128, 8
    $region17: #{tpu_custom_call.1} parent=1 // pred_fallthru
      _
    // Predicated region
    $region18: #{tpu_custom_call.1} parent=1 // pred_check
      _
    $region19: #{tpu_custom_call.1} parent=1 // pred_check_branch
      %51 = sbr.rel (0) target = $region21
    $region20: #{tpu_custom_call.1} parent=1 // pred_region
      _
    $region21: #{tpu_custom_call.1} parent=1 // pred_fallthru
      _
    // Predicated region
    $region22: #{tpu_custom_call.1} parent=1 // pred_check
      _
    $region23: #{tpu_custom_call.1} parent=1 // pred_check_branch
      %53 = sbr.rel (0) target = $region25
    $region24: #{tpu_custom_call.1} parent=1 // pred_region
      _
    $region25: #{tpu_custom_call.1} parent=1 // pred_fallthru
      _
    // Predicated region
    $region26: #{tpu_custom_call.1} parent=1 // pred_check
      _
    $region27: #{tpu_custom_call.1} parent=1 // pred_check_branch
      %55 = sbr.rel (0) target = $region29
    $region28: #{tpu_custom_call.1} parent=1 // pred_region
      _
    $region29: #{tpu_custom_call.1} parent=1 // pred_fallthru
      _
    // Predicated region
    $region30: #{tpu_custom_call.1} parent=1 // pred_check
      _
    $region31: #{tpu_custom_call.1} parent=1 // pred_check_branch
      %57 = sbr.rel (0) target = $region33
    $region32: #{tpu_custom_call.1} parent=1 // pred_region
      %59 = vsyncadd [#allocation7], 0
      %s60 = sshll.u32 %s7, 4
      %s61 = int_to_ptr.hbm [resolvable:$true] %s60
      %s62 = sshll.u32 [#allocation8], 4
      %s63 = int_to_ptr.vmem [resolvable:$true] %s62
      %68 = dma.hbm_to_vmem [thread:$0]  %s61, 2048, %s63, [#allocation7], 128, 128, 8
    $region33: #{tpu_custom_call.1} parent=1 // pred_fallthru
      _
    // Predicated region
    $region34: #{tpu_custom_call.1} parent=1 // pred_check
      _
    $region35: #{tpu_custom_call.1} parent=1 // pred_check_branch
      %70 = sbr.rel (0) target = $region37
    $region36: #{tpu_custom_call.1} parent=1 // pred_region
      _
    $region37: #{tpu_custom_call.1} parent=1 // pred_fallthru
      _
    // Predicated region
    $region38: #{tpu_custom_call.1} parent=1 // pred_check
      _
    $region39: #{tpu_custom_call.1} parent=1 // pred_check_branch
      %72 = sbr.rel (0) target = $region41
    $region40: #{tpu_custom_call.1} parent=1 // pred_region
      %74 = dma.done [#allocation4], 256
    $region41: #{tpu_custom_call.1} parent=1 // pred_fallthru
      _
    // Predicated region
    $region42: #{tpu_custom_call.1} parent=1 // pred_check
      _
    $region43: #{tpu_custom_call.1} parent=1 // pred_check_branch
      %76 = sbr.rel (0) target = $region45
    $region44: #{tpu_custom_call.1} parent=1 // pred_region
      %78 = dma.done [#allocation7], 256
    $region45: #{tpu_custom_call.1} parent=1 // pred_fallthru
      _
    // Predicated region
    $region46: #{tpu_custom_call.1} parent=1 // pred_check
      _
    $region47: #{tpu_custom_call.1} parent=1 // pred_check_branch
      %80 = sbr.rel (0) target = $region49
    $region48: #{tpu_custom_call.1} parent=1 // pred_region
      %82 = dma.done [#allocation7], 2048
    $region49: #{tpu_custom_call.1} parent=1 // pred_fallthru
      _
    %p83 = scmp.eq.s32.totalorder 0, 0
    // Predicated region
    $region50: #{tpu_custom_call.1} parent=1 // pred_check
      %p84 = pneg %p83
    $region51: #{tpu_custom_call.1} parent=1 // pred_check_branch
      %86 = sbr.rel (%p84) target = $region53
    $region52: #{tpu_custom_call.1} parent=1 // pred_region
      %87 = vst [vmem:[#allocation10] sm:$0xff] 0.0
      %88 = vst [vmem:[#allocation10 + $0x8] sm:$0xff] 0.0
      %vm89 = vcmask 7168
      %90 = vst.msk [vmem:[#allocation2] sm:$0xff] %vm89, 0.0
      %91 = vst.msk [vmem:[#allocation2 + $0x8] sm:$0xff] %vm89, 0.0
    $region53: #{tpu_custom_call.1} parent=1 // pred_fallthru
      _
    %v92 = vld [vmem:[%s0] sm:$0xff]
    %v93 = vld [vmem:[%s0 + $0x8] sm:$0xff]
    %v94 = vld [vmem:[%s0 + $0x10] sm:$0xff]
    %v95 = vld [vmem:[%s0 + $0x18] sm:$0xff]
    %v96 = vld [vmem:[%s0 + $0x20] sm:$0xff]
    %v97 = vld [vmem:[%s0 + $0x28] sm:$0xff]
    %v98 = vld [vmem:[%s0 + $0x30] sm:$0xff]
    %v99 = vld [vmem:[%s0 + $0x38] sm:$0xff]
    %v100 = vld [vmem:[%s0 + $0x40] sm:$0xff]
    %v101 = vld [vmem:[%s0 + $0x48] sm:$0xff]
    %v102 = vld [vmem:[%s0 + $0x50] sm:$0xff]
    %v103 = vld [vmem:[%s0 + $0x58] sm:$0xff]
    %v104 = vld [vmem:[%s0 + $0x60] sm:$0xff]
    %v105 = vld [vmem:[%s0 + $0x68] sm:$0xff]
    %v106 = vld [vmem:[%s0 + $0x70] sm:$0xff]
    %v107 = vld [vmem:[%s0 + $0x78] sm:$0xff]
    %v108 = vld [vmem:[%s0 + $0x80] sm:$0xff]
    %v109 = vld [vmem:[%s0 + $0x88] sm:$0xff]
    %v110 = vld [vmem:[%s0 + $0x90] sm:$0xff]
    %v111 = vld [vmem:[%s0 + $0x98] sm:$0xff]
    %v112 = vld [vmem:[%s0 + $0xa0] sm:$0xff]
    %v113 = vld [vmem:[%s0 + $0xa8] sm:$0xff]
    %v114 = vld [vmem:[%s0 + $0xb0] sm:$0xff]
    %v115 = vld [vmem:[%s0 + $0xb8] sm:$0xff]
    %v116 = vld [vmem:[%s0 + $0xc0] sm:$0xff]
    %v117 = vld [vmem:[%s0 + $0xc8] sm:$0xff]
    %v118 = vld [vmem:[%s0 + $0xd0] sm:$0xff]
    %v119 = vld [vmem:[%s0 + $0xd8] sm:$0xff]
    %v120 = vld [vmem:[%s0 + $0xe0] sm:$0xff]
    %v121 = vld [vmem:[%s0 + $0xe8] sm:$0xff]
    %v122 = vld [vmem:[%s0 + $0xf0] sm:$0xff]
    %v123 = vld [vmem:[%s0 + $0xf8] sm:$0xff]
    %v124 = vld [vmem:[%s1] sm:$0x3]
    %v125 = vlaneseq
    %v126 = vand.u32 %v125, 127
    %v127 = vlaneseq
    %v128 = vshrl.u32 %v127, 7
    %v129 = vadd.s32 %v128, 8
    %130 = vset.pattern.permute.xlu0 0
    %131 = vperm.xlu0 %130, %v92
    %v132 = vpop.permute.xlu0 %131
    %133 = vset.pattern.permute.xlu0 0
    %134 = vperm.xlu0 %133, %v93
    %v135 = vpop.permute.xlu0 %134
    %136 = vset.pattern.permute.xlu0 0
    %137 = vperm.xlu0 %136, %v94
    %v138 = vpop.permute.xlu0 %137
    %139 = vset.pattern.permute.xlu0 0
    %140 = vperm.xlu0 %139, %v95
    %v141 = vpop.permute.xlu0 %140
    %142 = vset.pattern.permute.xlu0 0
    %143 = vperm.xlu0 %142, %v96
    %v144 = vpop.permute.xlu0 %143
    %145 = vset.pattern.permute.xlu0 0
    %146 = vperm.xlu0 %145, %v97
    %v147 = vpop.permute.xlu0 %146
    %148 = vset.pattern.permute.xlu0 0
    %149 = vperm.xlu0 %148, %v98
    %v150 = vpop.permute.xlu0 %149
    %151 = vset.pattern.permute.xlu0 0
    %152 = vperm.xlu0 %151, %v99
    %v153 = vpop.permute.xlu0 %152
    %154 = vset.pattern.permute.xlu0 0
    %155 = vperm.xlu0 %154, %v100
    %v156 = vpop.permute.xlu0 %155
    %157 = vset.pattern.permute.xlu0 0
    %158 = vperm.xlu0 %157, %v101
    %v159 = vpop.permute.xlu0 %158
    %160 = vset.pattern.permute.xlu0 0
    %161 = vperm.xlu0 %160, %v102
    %v162 = vpop.permute.xlu0 %161
    %163 = vset.pattern.permute.xlu0 0
    %164 = vperm.xlu0 %163, %v103
    %v165 = vpop.permute.xlu0 %164
    %166 = vset.pattern.permute.xlu0 0
    %167 = vperm.xlu0 %166, %v104
    %v168 = vpop.permute.xlu0 %167
    %169 = vset.pattern.permute.xlu0 0
    %170 = vperm.xlu0 %169, %v105
    %v171 = vpop.permute.xlu0 %170
    %172 = vset.pattern.permute.xlu0 0
    %173 = vperm.xlu0 %172, %v106
    %v174 = vpop.permute.xlu0 %173
    %175 = vset.pattern.permute.xlu0 0
    %176 = vperm.xlu0 %175, %v107
    %v177 = vpop.permute.xlu0 %176
    %178 = vset.pattern.permute.xlu0 0
    %179 = vperm.xlu0 %178, %v108
    %v180 = vpop.permute.xlu0 %179
    %181 = vset.pattern.permute.xlu0 0
    %182 = vperm.xlu0 %181, %v109
    %v183 = vpop.permute.xlu0 %182
    %184 = vset.pattern.permute.xlu0 0
    %185 = vperm.xlu0 %184, %v110
    %v186 = vpop.permute.xlu0 %185
    %187 = vset.pattern.permute.xlu0 0
    %188 = vperm.xlu0 %187, %v111
    %v189 = vpop.permute.xlu0 %188
    %190 = vset.pattern.permute.xlu0 0
    %191 = vperm.xlu0 %190, %v112
    %v192 = vpop.permute.xlu0 %191
    %193 = vset.pattern.permute.xlu0 0
    %194 = vperm.xlu0 %193, %v113
    %v195 = vpop.permute.xlu0 %194
    %196 = vset.pattern.permute.xlu0 0
    %197 = vperm.xlu0 %196, %v114
    %v198 = vpop.permute.xlu0 %197
    %199 = vset.pattern.permute.xlu0 0
    %200 = vperm.xlu0 %199, %v115
    %v201 = vpop.permute.xlu0 %200
    %202 = vset.pattern.permute.xlu0 0
    %203 = vperm.xlu0 %202, %v116
    %v204 = vpop.permute.xlu0 %203
    %205 = vset.pattern.permute.xlu0 0
    %206 = vperm.xlu0 %205, %v117
    %v207 = vpop.permute.xlu0 %206
    %208 = vset.pattern.permute.xlu0 0
    %209 = vperm.xlu0 %208, %v118
    %v210 = vpop.permute.xlu0 %209
    %211 = vset.pattern.permute.xlu0 0
    %212 = vperm.xlu0 %211, %v119
    %v213 = vpop.permute.xlu0 %212
    %214 = vset.pattern.permute.xlu0 0
    %215 = vperm.xlu0 %214, %v120
    %v216 = vpop.permute.xlu0 %215
    %217 = vset.pattern.permute.xlu0 0
    %218 = vperm.xlu0 %217, %v121
    %v219 = vpop.permute.xlu0 %218
    %220 = vset.pattern.permute.xlu0 0
    %221 = vperm.xlu0 %220, %v122
    %v222 = vpop.permute.xlu0 %221
    %223 = vset.pattern.permute.xlu0 0
    %224 = vperm.xlu0 %223, %v123
    %v225 = vpop.permute.xlu0 %224
    %vm226 = vcmp.eq.s32.totalorder %v132, %v126
    %vm227 = vcmp.eq.s32.totalorder %v135, %v126
    %vm228 = vcmp.eq.s32.totalorder %v138, %v126
    %vm229 = vcmp.eq.s32.totalorder %v141, %v126
    %vm230 = vcmp.eq.s32.totalorder %v144, %v126
    %vm231 = vcmp.eq.s32.totalorder %v147, %v126
    %vm232 = vcmp.eq.s32.totalorder %v150, %v126
    %vm233 = vcmp.eq.s32.totalorder %v153, %v126
    %vm234 = vcmp.eq.s32.totalorder %v156, %v126
    %vm235 = vcmp.eq.s32.totalorder %v159, %v126
    %vm236 = vcmp.eq.s32.totalorder %v162, %v126
    %vm237 = vcmp.eq.s32.totalorder %v165, %v126
    %vm238 = vcmp.eq.s32.totalorder %v168, %v126
    %vm239 = vcmp.eq.s32.totalorder %v171, %v126
    %vm240 = vcmp.eq.s32.totalorder %v174, %v126
    %vm241 = vcmp.eq.s32.totalorder %v177, %v126
    %vm242 = vcmp.eq.s32.totalorder %v180, %v126
    %vm243 = vcmp.eq.s32.totalorder %v183, %v126
    %vm244 = vcmp.eq.s32.totalorder %v186, %v126
    %vm245 = vcmp.eq.s32.totalorder %v189, %v126
    %vm246 = vcmp.eq.s32.totalorder %v192, %v126
    %vm247 = vcmp.eq.s32.totalorder %v195, %v126
    %vm248 = vcmp.eq.s32.totalorder %v198, %v126
    %vm249 = vcmp.eq.s32.totalorder %v201, %v126
    %vm250 = vcmp.eq.s32.totalorder %v204, %v126
    %vm251 = vcmp.eq.s32.totalorder %v207, %v126
    %vm252 = vcmp.eq.s32.totalorder %v210, %v126
    %vm253 = vcmp.eq.s32.totalorder %v213, %v126
    %vm254 = vcmp.eq.s32.totalorder %v216, %v126
    %vm255 = vcmp.eq.s32.totalorder %v219, %v126
    %vm256 = vcmp.eq.s32.totalorder %v222, %v126
    %vm257 = vcmp.eq.s32.totalorder %v225, %v126
    %v258 = vsel %vm226, 1, 0
    %v259 = vsel %vm227, 1, 0
    %v260 = vsel %vm228, 1, 0
    %v261 = vsel %vm229, 1, 0
    %v262 = vsel %vm230, 1, 0
    %v263 = vsel %vm231, 1, 0
    %v264 = vsel %vm232, 1, 0
    %v265 = vsel %vm233, 1, 0
    %v266 = vsel %vm234, 1, 0
    %v267 = vsel %vm235, 1, 0
    %v268 = vsel %vm236, 1, 0
    %v269 = vsel %vm237, 1, 0
    %v270 = vsel %vm238, 1, 0
    %v271 = vsel %vm239, 1, 0
    %v272 = vsel %vm240, 1, 0
    %v273 = vsel %vm241, 1, 0
    %v274 = vsel %vm242, 1, 0
    %v275 = vsel %vm243, 1, 0
    %v276 = vsel %vm244, 1, 0
    %v277 = vsel %vm245, 1, 0
    %v278 = vsel %vm246, 1, 0
    %v279 = vsel %vm247, 1, 0
    %v280 = vsel %vm248, 1, 0
    %v281 = vsel %vm249, 1, 0
    %v282 = vsel %vm250, 1, 0
    %v283 = vsel %vm251, 1, 0
    %v284 = vsel %vm252, 1, 0
    %v285 = vsel %vm253, 1, 0
    %v286 = vsel %vm254, 1, 0
    %v287 = vsel %vm255, 1, 0
    %v288 = vsel %vm256, 1, 0
    %v289 = vsel %vm257, 1, 0
    %v290 = vcvt.s32.f32 %v258
    %v291 = vcvt.s32.f32 %v259
    %v292 = vcvt.s32.f32 %v260
    %v293 = vcvt.s32.f32 %v261
    %v294 = vcvt.s32.f32 %v262
    %v295 = vcvt.s32.f32 %v263
    %v296 = vcvt.s32.f32 %v264
    %v297 = vcvt.s32.f32 %v265
    %v298 = vcvt.s32.f32 %v266
    %v299 = vcvt.s32.f32 %v267
    %v300 = vcvt.s32.f32 %v268
    %v301 = vcvt.s32.f32 %v269
    %v302 = vcvt.s32.f32 %v270
    %v303 = vcvt.s32.f32 %v271
    %v304 = vcvt.s32.f32 %v272
    %v305 = vcvt.s32.f32 %v273
    %v306 = vcvt.s32.f32 %v274
    %v307 = vcvt.s32.f32 %v275
    %v308 = vcvt.s32.f32 %v276
    %v309 = vcvt.s32.f32 %v277
    %v310 = vcvt.s32.f32 %v278
    %v311 = vcvt.s32.f32 %v279
    %v312 = vcvt.s32.f32 %v280
    %v313 = vcvt.s32.f32 %v281
    %v314 = vcvt.s32.f32 %v282
    %v315 = vcvt.s32.f32 %v283
    %v316 = vcvt.s32.f32 %v284
    %v317 = vcvt.s32.f32 %v285
    %v318 = vcvt.s32.f32 %v286
    %v319 = vcvt.s32.f32 %v287
    %v320 = vcvt.s32.f32 %v288
    %v321 = vcvt.s32.f32 %v289
    %v322 = vperm.slane %v124, 0
    %v323 = vperm.slane %v124, 1
    %vm324 = vcmp.eq.s32.totalorder %v128, %v322
    %vm325 = vcmp.eq.s32.totalorder %v128, %v323
    %vm326 = vcmp.eq.s32.totalorder %v129, %v322
    %vm327 = vcmp.eq.s32.totalorder %v129, %v323
    %v328 = vsel %vm324, 1, 0
    %v329 = vsel %vm325, 1, 0
    %v330 = vsel %vm326, 1, 0
    %v331 = vsel %vm327, 1, 0
    %v332 = vcvt.s32.f32 %v328
    %v333 = vcvt.s32.f32 %v329
    %v334 = vcvt.s32.f32 %v330
    %v335 = vcvt.s32.f32 %v331
    %v336 = vld [vmem:[#allocation3] sm:$0xff]
    %v337 = vld [vmem:[#allocation3 + $0x8] sm:$0xff]
    %vm338 = vcmask 130048
    %v340 = vsel %vm338, %v290, 0
    %v343 = vsel %vm338, %v291, 0
    %v346 = vsel %vm338, %v292, 0
    %v349 = vsel %vm338, %v293, 0
    %v352 = vsel %vm338, %v294, 0
    %v355 = vsel %vm338, %v295, 0
    %v358 = vsel %vm338, %v296, 0
    %v361 = vsel %vm338, %v297, 0
    %v364 = vsel %vm338, %v298, 0
    %v367 = vsel %vm338, %v299, 0
    %v370 = vsel %vm338, %v300, 0
    %v373 = vsel %vm338, %v301, 0
    %v376 = vsel %vm338, %v302, 0
    %v379 = vsel %vm338, %v303, 0
    %v382 = vsel %vm338, %v304, 0
    %v385 = vsel %vm338, %v305, 0
    %v388 = vsel %vm338, %v306, 0
    %v391 = vsel %vm338, %v307, 0
    %v394 = vsel %vm338, %v308, 0
    %v397 = vsel %vm338, %v309, 0
    %v400 = vsel %vm338, %v310, 0
    %v403 = vsel %vm338, %v311, 0
    %v406 = vsel %vm338, %v312, 0
    %v409 = vsel %vm338, %v313, 0
    %v412 = vsel %vm338, %v314, 0
    %v415 = vsel %vm338, %v315, 0
    %v418 = vsel %vm338, %v316, 0
    %v421 = vsel %vm338, %v317, 0
    %v424 = vsel %vm338, %v318, 0
    %v427 = vsel %vm338, %v319, 0
    %v430 = vsel %vm338, %v320, 0
    %v433 = vsel %vm338, %v321, 0
    %435 = vmatpush.msra.mxu0 0.0
    %436 = vmatpush.msra.mxu0 0.0
    %437 = vmatpush.msra.mxu0 0.0
    %438 = vmatpush.msra.mxu0 0.0
    %439 = vmatpush.msra.mxu0 0.0
    %440 = vmatpush.msra.mxu0 0.0
    %441 = vmatpush.msra.mxu0 0.0
    %442 = vmatpush.msra.mxu0 0.0
    %443 = vmatpush.msra.mxu0 0.0
    %444 = vmatpush.msra.mxu0 0.0
    %445 = vmatpush.msra.mxu0 0.0
    %446 = vmatpush.msra.mxu0 0.0
    %447 = vmatpush.msra.mxu0 0.0
    %448 = vmatpush.msra.mxu0 0.0
    %449 = vmatpush.msra.mxu0 %v337
    %450 = vmatpush.msra.mxu0 %v336
    %451 = vmatmul.f32.gmra.mxu0 %v340
    %v452 = vpop.f32.mrf.mxu0
    %v453 = vadd.f32 0.0, %v452
    %454 = vmatmul.f32.gmra.mxu0 %v343
    %v455 = vpop.f32.mrf.mxu0
    %v456 = vadd.f32 0.0, %v455
    %457 = vmatmul.f32.gmra.mxu0 %v346
    %v458 = vpop.f32.mrf.mxu0
    %v459 = vadd.f32 0.0, %v458
    %460 = vmatmul.f32.gmra.mxu0 %v349
    %v461 = vpop.f32.mrf.mxu0
    %v462 = vadd.f32 0.0, %v461
    %463 = vmatmul.f32.gmra.mxu0 %v352
    %v464 = vpop.f32.mrf.mxu0
    %v465 = vadd.f32 0.0, %v464
    %466 = vmatmul.f32.gmra.mxu0 %v355
    %v467 = vpop.f32.mrf.mxu0
    %v468 = vadd.f32 0.0, %v467
    %469 = vmatmul.f32.gmra.mxu0 %v358
    %v470 = vpop.f32.mrf.mxu0
    %v471 = vadd.f32 0.0, %v470
    %472 = vmatmul.f32.gmra.mxu0 %v361
    %v473 = vpop.f32.mrf.mxu0
    %v474 = vadd.f32 0.0, %v473
    %475 = vmatmul.f32.gmra.mxu0 %v364
    %v476 = vpop.f32.mrf.mxu0
    %v477 = vadd.f32 0.0, %v476
    %478 = vmatmul.f32.gmra.mxu0 %v367
    %v479 = vpop.f32.mrf.mxu0
    %v480 = vadd.f32 0.0, %v479
    %481 = vmatmul.f32.gmra.mxu0 %v370
    %v482 = vpop.f32.mrf.mxu0
    %v483 = vadd.f32 0.0, %v482
    %484 = vmatmul.f32.gmra.mxu0 %v373
    %v485 = vpop.f32.mrf.mxu0
    %v486 = vadd.f32 0.0, %v485
    %487 = vmatmul.f32.gmra.mxu0 %v376
    %v488 = vpop.f32.mrf.mxu0
    %v489 = vadd.f32 0.0, %v488
    %490 = vmatmul.f32.gmra.mxu0 %v379
    %v491 = vpop.f32.mrf.mxu0
    %v492 = vadd.f32 0.0, %v491
    %493 = vmatmul.f32.gmra.mxu0 %v382
    %v494 = vpop.f32.mrf.mxu0
    %v495 = vadd.f32 0.0, %v494
    %496 = vmatmul.f32.gmra.mxu0 %v385
    %v497 = vpop.f32.mrf.mxu0
    %v498 = vadd.f32 0.0, %v497
    %499 = vmatmul.f32.gmra.mxu0 %v388
    %v500 = vpop.f32.mrf.mxu0
    %v501 = vadd.f32 0.0, %v500
    %502 = vmatmul.f32.gmra.mxu0 %v391
    %v503 = vpop.f32.mrf.mxu0
    %v504 = vadd.f32 0.0, %v503
    %505 = vmatmul.f32.gmra.mxu0 %v394
    %v506 = vpop.f32.mrf.mxu0
    %v507 = vadd.f32 0.0, %v506
    %508 = vmatmul.f32.gmra.mxu0 %v397
    %v509 = vpop.f32.mrf.mxu0
    %v510 = vadd.f32 0.0, %v509
    %511 = vmatmul.f32.gmra.mxu0 %v400
    %v512 = vpop.f32.mrf.mxu0
    %v513 = vadd.f32 0.0, %v512
    %514 = vmatmul.f32.gmra.mxu0 %v403
    %v515 = vpop.f32.mrf.mxu0
    %v516 = vadd.f32 0.0, %v515
    %517 = vmatmul.f32.gmra.mxu0 %v406
    %v518 = vpop.f32.mrf.mxu0
    %v519 = vadd.f32 0.0, %v518
    %520 = vmatmul.f32.gmra.mxu0 %v409
    %v521 = vpop.f32.mrf.mxu0
    %v522 = vadd.f32 0.0, %v521
    %523 = vmatmul.f32.gmra.mxu0 %v412
    %v524 = vpop.f32.mrf.mxu0
    %v525 = vadd.f32 0.0, %v524
    %526 = vmatmul.f32.gmra.mxu0 %v415
    %v527 = vpop.f32.mrf.mxu0
    %v528 = vadd.f32 0.0, %v527
    %529 = vmatmul.f32.gmra.mxu0 %v418
    %v530 = vpop.f32.mrf.mxu0
    %v531 = vadd.f32 0.0, %v530
    %532 = vmatmul.f32.gmra.mxu0 %v421
    %v533 = vpop.f32.mrf.mxu0
    %v534 = vadd.f32 0.0, %v533
    %535 = vmatmul.f32.gmra.mxu0 %v424
    %v536 = vpop.f32.mrf.mxu0
    %v537 = vadd.f32 0.0, %v536
    %538 = vmatmul.f32.gmra.mxu0 %v427
    %v539 = vpop.f32.mrf.mxu0
    %v540 = vadd.f32 0.0, %v539
    %541 = vmatmul.f32.gmra.mxu0 %v430
    %v542 = vpop.f32.mrf.mxu0
    %v543 = vadd.f32 0.0, %v542
    %544 = vmatmul.f32.gmra.mxu0 %v433
    %v545 = vpop.f32.mrf.mxu0
    %v546 = vadd.f32 0.0, %v545
    %547 = vdwg.mxu0
    %v548 = vld [vmem:[#allocation10] sm:$0xff]
    %v549 = vld [vmem:[#allocation10 + $0x8] sm:$0xff]
    %550 = vmatpush.msra.mxu0 %v498
    %551 = vmatpush.msra.mxu0 %v495
    %552 = vmatpush.msra.mxu0 %v492
    %553 = vmatpush.msra.mxu0 %v489
    %554 = vmatpush.msra.mxu0 %v486
    %555 = vmatpush.msra.mxu0 %v483
    %556 = vmatpush.msra.mxu0 %v480
    %557 = vmatpush.msra.mxu0 %v477
    %558 = vmatpush.msra.mxu0 %v474
    %559 = vmatpush.msra.mxu0 %v471
    %560 = vmatpush.msra.mxu0 %v468
    %561 = vmatpush.msra.mxu0 %v465
    %562 = vmatpush.msra.mxu0 %v462
    %563 = vmatpush.msra.mxu0 %v459
    %564 = vmatpush.msra.mxu0 %v456
    %565 = vmatpush.msra.mxu0 %v453
    %566 = vmatmul.f32.gmra.mxu0 %v332
    %v567 = vpop.f32.mrf.mxu0
    %v568 = vadd.f32 0.0, %v567
    %569 = vmatmul.f32.gmra.mxu0 %v334
    %v570 = vpop.f32.mrf.mxu0
    %v571 = vadd.f32 0.0, %v570
    %572 = vdwg.mxu0
    %573 = vmatpush.msra.mxu0 %v546
    %574 = vmatpush.msra.mxu0 %v543
    %575 = vmatpush.msra.mxu0 %v540
    %576 = vmatpush.msra.mxu0 %v537
    %577 = vmatpush.msra.mxu0 %v534
    %578 = vmatpush.msra.mxu0 %v531
    %579 = vmatpush.msra.mxu0 %v528
    %580 = vmatpush.msra.mxu0 %v525
    %581 = vmatpush.msra.mxu0 %v522
    %582 = vmatpush.msra.mxu0 %v519
    %583 = vmatpush.msra.mxu0 %v516
    %584 = vmatpush.msra.mxu0 %v513
    %585 = vmatpush.msra.mxu0 %v510
    %586 = vmatpush.msra.mxu0 %v507
    %587 = vmatpush.msra.mxu0 %v504
    %588 = vmatpush.msra.mxu0 %v501
    %589 = vmatmul.f32.gmra.mxu0 %v333
    %v590 = vpop.f32.mrf.mxu0
    %v591 = vadd.f32 %v568, %v590
    %592 = vmatmul.f32.gmra.mxu0 %v335
    %v593 = vpop.f32.mrf.mxu0
    %v594 = vadd.f32 %v571, %v593
    %595 = vdwg.mxu0
    %v596 = vadd.f32 %v548, %v591
    %v597 = vadd.f32 %v549, %v594
    %598 = vst [vmem:[#allocation10] sm:$0xff] %v596
    %599 = vst [vmem:[#allocation10 + $0x8] sm:$0xff] %v597
    %v600 = vld [vmem:[#allocation2] sm:$0xff]
    %v601 = vld [vmem:[#allocation2 + $0x8] sm:$0xff]
    %v602 = vadd.f32 %v332, %v333
    %603 = vadd.xlane.f32.xlu0 %v602
    %v604 = vpop.xlane.xlu0 %603
    %v605 = vadd.f32 %v334, %v335
    %606 = vadd.xlane.f32.xlu0 %v605
    %v607 = vpop.xlane.xlu0 %606
    %v608 = vadd.f32 %v600, %v604
    %v609 = vadd.f32 %v601, %v607
    %vm610 = vcmask 7168
    %611 = vst.msk [vmem:[#allocation2] sm:$0xff] %vm610, %v608
    %612 = vst.msk [vmem:[#allocation2 + $0x8] sm:$0xff] %vm610, %v609
    // Predicated region
    $region54: #{tpu_custom_call.1} parent=1 // pred_check
      %p613 = pneg %p83
    $region55: #{tpu_custom_call.1} parent=1 // pred_check_branch
      %615 = sbr.rel (%p613) target = $region57
    $region56: #{tpu_custom_call.1} parent=1 // pred_region
      %v616 = vld [vmem:[#allocation6] sm:$0xff]
      %v617 = vld [vmem:[#allocation6 + $0x8] sm:$0xff]
      %v618 = vld [vmem:[%s4] sm:$0xff]
      %v619 = vld [vmem:[%s4 + $0x8] sm:$0xff]
      %v620 = vld [vmem:[%s4 + $0x10] sm:$0xff]
      %v621 = vld [vmem:[%s4 + $0x18] sm:$0xff]
      %v622 = vld [vmem:[%s4 + $0x20] sm:$0xff]
      %v623 = vld [vmem:[%s4 + $0x28] sm:$0xff]
      %v624 = vld [vmem:[%s4 + $0x30] sm:$0xff]
      %v625 = vld [vmem:[%s4 + $0x38] sm:$0xff]
      %v626 = vld [vmem:[%s4 + $0x40] sm:$0xff]
      %v627 = vld [vmem:[%s4 + $0x48] sm:$0xff]
      %v628 = vld [vmem:[%s4 + $0x50] sm:$0xff]
      %v629 = vld [vmem:[%s4 + $0x58] sm:$0xff]
      %v630 = vld [vmem:[%s4 + $0x60] sm:$0xff]
      %v631 = vld [vmem:[%s4 + $0x68] sm:$0xff]
      %v632 = vld [vmem:[%s4 + $0x70] sm:$0xff]
      %v633 = vld [vmem:[%s4 + $0x78] sm:$0xff]
      %v634 = vld [vmem:[#allocation10] sm:$0xff]
      %v635 = vld [vmem:[#allocation10 + $0x8] sm:$0xff]
      %v636 = vld [vmem:[#allocation2] sm:$0xff]
      %v637 = vld [vmem:[#allocation2 + $0x8] sm:$0xff]
      %v638 = vld [vmem:[%s5] sm:$0x1]
      %v640 = vperm.slane %v638, 0
      %642 = vmatpush.msra.mxu0 %v633
      %643 = vmatpush.msra.mxu0 %v632
      %644 = vmatpush.msra.mxu0 %v631
      %645 = vmatpush.msra.mxu0 %v630
      %646 = vmatpush.msra.mxu0 %v629
      %647 = vmatpush.msra.mxu0 %v628
      %648 = vmatpush.msra.mxu0 %v627
      %649 = vmatpush.msra.mxu0 %v626
      %650 = vmatpush.msra.mxu0 %v625
      %651 = vmatpush.msra.mxu0 %v624
      %652 = vmatpush.msra.mxu0 %v623
      %653 = vmatpush.msra.mxu0 %v622
      %654 = vmatpush.msra.mxu0 %v621
      %655 = vmatpush.msra.mxu0 %v620
      %656 = vmatpush.msra.mxu0 %v619
      %657 = vmatpush.msra.mxu0 %v618
      %658 = vmatmul.f32.gmra.mxu0 %v616
      %v659 = vpop.f32.mrf.mxu0
      %v660 = vadd.f32 %v640, %v659
      %661 = vmatmul.f32.gmra.mxu0 %v617
      %v662 = vpop.f32.mrf.mxu0
      %v663 = vadd.f32 %v640, %v662
      %664 = vdwg.mxu0
      %666 = vset.pattern.permute.xlu0 0
      %667 = vperm.xlu0 %666, %v636
      %v668 = vpop.permute.xlu0 %667
      %671 = vset.pattern.permute.xlu0 0
      %672 = vperm.xlu0 %671, %v637
      %v673 = vpop.permute.xlu0 %672
      %v675 = vmul.f32 %v668, %v660
      %v676 = vmul.f32 %v673, %v663
      %v677 = vadd.f32 %v634, %v675
      %v678 = vadd.f32 %v635, %v676
      %679 = vst [vmem:[#allocation10] sm:$0xff] %v677
      %680 = vst [vmem:[#allocation10 + $0x8] sm:$0xff] %v678
      %v681 = vld [vmem:[%s6] sm:$0xff]
      %v682 = vld [vmem:[%s6 + $0x8] sm:$0xff]
      %v683 = vld [vmem:[%s6 + $0x10] sm:$0xff]
      %v684 = vld [vmem:[%s6 + $0x18] sm:$0xff]
      %v685 = vld [vmem:[%s6 + $0x20] sm:$0xff]
      %v686 = vld [vmem:[%s6 + $0x28] sm:$0xff]
      %v687 = vld [vmem:[%s6 + $0x30] sm:$0xff]
      %v688 = vld [vmem:[%s6 + $0x38] sm:$0xff]
      %v689 = vld [vmem:[%s6 + $0x40] sm:$0xff]
      %v690 = vld [vmem:[%s6 + $0x48] sm:$0xff]
      %v691 = vld [vmem:[%s6 + $0x50] sm:$0xff]
      %v692 = vld [vmem:[%s6 + $0x58] sm:$0xff]
      %v693 = vld [vmem:[%s6 + $0x60] sm:$0xff]
      %v694 = vld [vmem:[%s6 + $0x68] sm:$0xff]
      %v695 = vld [vmem:[%s6 + $0x70] sm:$0xff]
      %v696 = vld [vmem:[%s6 + $0x78] sm:$0xff]
      %v697 = vld [vmem:[#allocation8] sm:$0xff]
      %v698 = vld [vmem:[#allocation8 + $0x8] sm:$0xff]
      %v699 = vld [vmem:[#allocation8 + $0x10] sm:$0xff]
      %v700 = vld [vmem:[#allocation8 + $0x18] sm:$0xff]
      %v701 = vld [vmem:[#allocation8 + $0x20] sm:$0xff]
      %v702 = vld [vmem:[#allocation8 + $0x28] sm:$0xff]
      %v703 = vld [vmem:[#allocation8 + $0x30] sm:$0xff]
      %v704 = vld [vmem:[#allocation8 + $0x38] sm:$0xff]
      %v705 = vld [vmem:[#allocation8 + $0x40] sm:$0xff]
      %v706 = vld [vmem:[#allocation8 + $0x48] sm:$0xff]
      %v707 = vld [vmem:[#allocation8 + $0x50] sm:$0xff]
      %v708 = vld [vmem:[#allocation8 + $0x58] sm:$0xff]
      %v709 = vld [vmem:[#allocation8 + $0x60] sm:$0xff]
      %v710 = vld [vmem:[#allocation8 + $0x68] sm:$0xff]
      %v711 = vld [vmem:[#allocation8 + $0x70] sm:$0xff]
      %v712 = vld [vmem:[#allocation8 + $0x78] sm:$0xff]
      %713 = vmatpush.msra.mxu0 %v712
      %714 = vmatpush.msra.mxu0 %v711
      %715 = vmatpush.msra.mxu0 %v710
      %716 = vmatpush.msra.mxu0 %v709
      %717 = vmatpush.msra.mxu0 %v708
      %718 = vmatpush.msra.mxu0 %v707
      %719 = vmatpush.msra.mxu0 %v706
      %720 = vmatpush.msra.mxu0 %v705
      %721 = vmatpush.msra.mxu0 %v704
      %722 = vmatpush.msra.mxu0 %v703
      %723 = vmatpush.msra.mxu0 %v702
      %724 = vmatpush.msra.mxu0 %v701
      %725 = vmatpush.msra.mxu0 %v700
      %726 = vmatpush.msra.mxu0 %v699
      %727 = vmatpush.msra.mxu0 %v698
      %728 = vmatpush.msra.mxu0 %v697
      %729 = vmatmul.f32.gmra.mxu0 %v677
      %v730 = vpop.f32.mrf.mxu0
      %v731 = vadd.f32 0.0, %v730
      %732 = vmatmul.f32.gmra.mxu0 %v678
      %v733 = vpop.f32.mrf.mxu0
      %v734 = vadd.f32 0.0, %v733
      %735 = vdwg.mxu0
      %736 = vmatpush.msra.mxu0 %v696
      %737 = vmatpush.msra.mxu0 %v695
      %738 = vmatpush.msra.mxu0 %v694
      %739 = vmatpush.msra.mxu0 %v693
      %740 = vmatpush.msra.mxu0 %v692
      %741 = vmatpush.msra.mxu0 %v691
      %742 = vmatpush.msra.mxu0 %v690
      %743 = vmatpush.msra.mxu0 %v689
      %744 = vmatpush.msra.mxu0 %v688
      %745 = vmatpush.msra.mxu0 %v687
      %746 = vmatpush.msra.mxu0 %v686
      %747 = vmatpush.msra.mxu0 %v685
      %748 = vmatpush.msra.mxu0 %v684
      %749 = vmatpush.msra.mxu0 %v683
      %750 = vmatpush.msra.mxu0 %v682
      %751 = vmatpush.msra.mxu0 %v681
      %752 = vmatmul.f32.gmra.mxu0 %v616
      %v753 = vpop.f32.mrf.mxu0
      %v754 = vadd.f32 %v731, %v753
      %755 = vmatmul.f32.gmra.mxu0 %v617
      %v756 = vpop.f32.mrf.mxu0
      %v757 = vadd.f32 %v734, %v756
      %758 = vdwg.mxu0
      %v759 = vld [vmem:[%s8] sm:$0x1]
      %v761 = vperm.slane %v759, 0
      %v763 = vadd.f32 %v754, %v761
      %v764 = vadd.f32 %v757, %v761
      %v765 = vmax.f32 %v763, 0.0
      %v766 = vmax.f32 %v764, 0.0
      %767 = vst [vmem:[#allocation9] sm:$0xff] %v765
      %768 = vst [vmem:[#allocation9 + $0x8] sm:$0xff] %v766
    $region57: #{tpu_custom_call.1} parent=1 // pred_fallthru
      _
    // Predicated region
    $region58: #{tpu_custom_call.1} parent=1 // pred_check
      _
    $region59: #{tpu_custom_call.1} parent=1 // pred_check_branch
      %770 = sbr.rel (0) target = $region61
    $region60: #{tpu_custom_call.1} parent=1 // pred_region
      %772 = vsyncadd [#allocation5], 0
      %s773 = sshll.u32 [#allocation9], 4
      %s774 = int_to_ptr.vmem [resolvable:$true] %s773
      %s775 = sshll.u32 %s9, 4
      %s776 = int_to_ptr.hbm [resolvable:$true] %s775
      %781 = dma.vmem_to_hbm [thread:$0]  %s774, 256, %s776, [#allocation5], 128, 128, 8
    $region61: #{tpu_custom_call.1} parent=1 // pred_fallthru
      _
    // Predicated region
    $region62: #{tpu_custom_call.1} parent=1 // pred_check
      _
    $region63: #{tpu_custom_call.1} parent=1 // pred_check_branch
      %783 = sbr.rel (0) target = $region65
    $region64: #{tpu_custom_call.1} parent=1 // pred_region
      %785 = vsyncadd [#allocation11], 0
      %s786 = sshll.u32 [#allocation10], 4
      %s787 = int_to_ptr.vmem [resolvable:$true] %s786
      %s788 = sshll.u32 %s10, 4
      %s789 = int_to_ptr.hbm [resolvable:$true] %s788
      %794 = dma.vmem_to_hbm [thread:$0]  %s787, 256, %s789, [#allocation11], 128, 128, 8
    $region65: #{tpu_custom_call.1} parent=1 // pred_fallthru
      _
    // Predicated region
    $region66: #{tpu_custom_call.1} parent=1 // pred_check
      _
    $region67: #{tpu_custom_call.1} parent=1 // pred_check_branch
      %796 = sbr.rel (0) target = $region69
    $region68: #{tpu_custom_call.1} parent=1 // pred_region
      %798 = dma.done [#allocation5], 256
    $region69: #{tpu_custom_call.1} parent=1 // pred_fallthru
      _
    // Predicated region
    $region70: #{tpu_custom_call.1} parent=1 // pred_check
      _
    $region71: #{tpu_custom_call.1} parent=1 // pred_check_branch
      %800 = sbr.rel (0) target = $region73
    $region72: #{tpu_custom_call.1} parent=1 // pred_region
      %802 = dma.done [#allocation11], 256
    $region73: #{tpu_custom_call.1} parent=1 // pred_fallthru
      _
    %803 = vsyncpa [#allocation4], 1
    %804 = vsyncpa [#allocation7], 1
    %805 = vsyncpa [#allocation5], 1
    %806 = vsyncpa [#allocation11], 1

</llo_original>
